<compile_context>
chip_gen: v5e
topology: v5e:2x2
jax: 0.10.0
libtpu: 0.0.40
codegen_flags: <defaults>
</compile_context>

<pallas_src>
import numpy as np
import jax
import jax.numpy as jnp
from jax.experimental import pallas as pl
from jax.experimental.pallas import tpu as pltpu

EMBED_DIM = 256
NUM_CLASSES = 8


# ---------------------------------------------------------------------------
# Pallas kernel: fused (folded fc+fuse) -> dropout(identity) -> pred -> sigmoid
# ---------------------------------------------------------------------------
def _decoder_head_kernel(x_ref, w1_ref, b1_ref, w2_ref, b2_ref, o_ref):
    # x_ref : (C_tot, TM)     bf16   resized raw features, channels-major
    # w1_ref: (EMBED, C_tot)  bf16   folded fc_k + linear_fuse weight
    # b1_ref: (EMBED, 1)      f32    folded bias
    # w2_ref: (NCLS, EMBED)   bf16   linear_pred weight
    # b2_ref: (NCLS, 1)       f32    linear_pred bias
    # o_ref : (NCLS, TM)      f32    lane-dense output block
    h = jnp.dot(w1_ref[...], x_ref[...], preferred_element_type=jnp.float32)
    h = h + b1_ref[...]                      # fused features (EMBED, TM), f32
    # Dropout(p=0.1) between linear_fuse and linear_pred: identity at eval.
    z = jnp.dot(w2_ref[...], h.astype(jnp.bfloat16),
                preferred_element_type=jnp.float32)
    z = z + b2_ref[...]
    # sigmoid: exp and approx reciprocal both run on the EUP slot.
    o_ref[...] = pl.reciprocal(1.0 + jnp.exp(-z), approx=True)


def _choose_tile(m, cap=2048):
    """Largest lane tile (multiple of 128) <= cap, keeping >=2 grid steps
    when possible so both v7x TensorCores are used."""
    m128 = ((m + 127) // 128) * 128
    tm = min(cap, m128)
    if m128 > 128 and m128 // tm < 2:
        tm = max(128, ((m128 // 2) // 128) * 128)
    return tm


def decoder_head(x_cm, w1, b1, w2, b2):
    """sigmoid(w2 @ (w1 @ x_cm + b1) + b2), x_cm is (C_tot, M) channels-major."""
    c_tot, m = x_cm.shape
    embed = w1.shape[0]
    ncls = w2.shape[0]

    tm = _choose_tile(m)
    m_pad = pl.cdiv(m, tm) * tm
    if m_pad != m:
        x_cm = jnp.pad(x_cm, ((0, 0), (0, m_pad - m)))

    out = pl.pallas_call(
        _decoder_head_kernel,
        out_shape=jax.ShapeDtypeStruct((ncls, m_pad), jnp.float32),
        grid_spec=pltpu.PrefetchScalarGridSpec(
            num_scalar_prefetch=0,
            grid=(m_pad // tm,),
            in_specs=[
                pl.BlockSpec((c_tot, tm), lambda i: (0, i)),
                pl.BlockSpec((embed, c_tot), lambda i: (0, 0)),
                pl.BlockSpec((embed, 1), lambda i: (0, 0)),
                pl.BlockSpec((ncls, embed), lambda i: (0, 0)),
                pl.BlockSpec((ncls, 1), lambda i: (0, 0)),
            ],
            out_specs=pl.BlockSpec((ncls, tm), lambda i: (0, i)),
        ),
        compiler_params=pltpu.CompilerParams(
            dimension_semantics=("parallel",),
        ),
    )(
        x_cm.astype(jnp.bfloat16),
        w1.astype(jnp.bfloat16),
        b1.reshape(embed, 1).astype(jnp.float32),
        w2.astype(jnp.bfloat16),
        b2.reshape(ncls, 1).astype(jnp.float32),
    )
    return out[:, :m]


# ---------------------------------------------------------------------------
# Glue: bilinear-resize matrices (exact match of F.interpolate align_corners=False)
# ---------------------------------------------------------------------------
def bilinear_matrix(out_size, in_size):
    if out_size == in_size:
        return jnp.eye(out_size, dtype=jnp.float32)
    scale = in_size / out_size
    i = np.arange(out_size, dtype=np.float64)
    src = (i + 0.5) * scale - 0.5
    src = np.clip(src, 0.0, None)
    x0 = np.minimum(np.floor(src).astype(np.int64), in_size - 1)
    x1 = np.minimum(x0 + 1, in_size - 1)
    frac = src - x0
    M = np.zeros((out_size, in_size), dtype=np.float32)
    M[np.arange(out_size), x0] += 1.0 - frac
    M[np.arange(out_size), x1] += frac
    return jnp.asarray(M)


# ---------------------------------------------------------------------------
# Parameters (same structure as the PyTorch module) and the algebraic fold
# ---------------------------------------------------------------------------
def init_params(key, nb_filter, embed_dim=EMBED_DIM, num_classes=NUM_CLASSES):
    params = {"fc_w": [], "fc_b": []}
    for c in nb_filter:
        key, k1, k2 = jax.random.split(key, 3)
        params["fc_w"].append(0.02 * jax.random.normal(k1, (embed_dim, c), jnp.float32))
        params["fc_b"].append(0.02 * jax.random.normal(k2, (embed_dim,), jnp.float32))
    key, k1, k2, k3, k4 = jax.random.split(key, 5)
    cin_fuse = embed_dim * len(nb_filter)
    params["fuse_w"] = 0.02 * jax.random.normal(k1, (embed_dim, cin_fuse), jnp.float32)
    params["fuse_b"] = 0.02 * jax.random.normal(k2, (embed_dim,), jnp.float32)
    params["pred_w"] = 0.02 * jax.random.normal(k3, (num_classes, embed_dim), jnp.float32)
    params["pred_b"] = 0.02 * jax.random.normal(k4, (num_classes,), jnp.float32)
    return params


def fold_params(params):
    """W1 = [fuse_w_k @ fc_w_k]_k  (256 x C_tot),  b1 = fuse_b + sum_k fuse_w_k @ fc_b_k."""
    embed = params["fuse_b"].shape[0]
    cols = []
    b1 = params["fuse_b"]
    for k in range(len(params["fc_w"])):
        fuse_wk = params["fuse_w"][:, k * embed:(k + 1) * embed]   # (256, 256)
        cols.append(fuse_wk @ params["fc_w"][k])                   # (256, C_k)
        b1 = b1 + fuse_wk @ params["fc_b"][k]
    return jnp.concatenate(cols, axis=1), b1


# ---------------------------------------------------------------------------
# MLP_Decoder forward
# ---------------------------------------------------------------------------
def mlp_decoder_forward(params, xs):
    """xs: list of NCHW float32 arrays (N, nb_filter[k], H_k, W_k)."""
    n, _, h0, w0 = xs[0].shape
    m = n * h0 * w0

    w1, b1 = fold_params(params)

    # Bilinear resize (align_corners=False) of the RAW low-channel inputs.
    # Exact: bilinear rows sum to 1, so resize commutes with the per-scale
    # channel Linear that was folded into w1/b1 above.
    cols = []
    for x in xs:
        _, c, h, w = x.shape
        mh = bilinear_matrix(h0, h)                       # (h0, h)
        mw = bilinear_matrix(w0, w)                       # (w0, w)
        y = jnp.einsum("oh,nchw->ncow", mh, x)
        y = jnp.einsum("pw,ncow->ncop", mw, y)            # (n, c, h0, w0)
        # channels-major flattening (C_k, N*H0*W0): lane-dense kernel input
        cols.append(jnp.transpose(y, (1, 0, 2, 3)).reshape(c, m))
    x_cm = jnp.concatenate(cols, axis=0)                  # (C_tot, M)

    # fused head kernel: (fc+fuse folded) -> dropout(id) -> pred -> sigmoid
    out = decoder_head(x_cm, w1, b1, params["pred_w"], params["pred_b"])
    out = out.reshape(NUM_CLASSES, n, h0, w0)
    return jnp.transpose(out, (1, 0, 2, 3))               # NCHW, matches PyTorch


# ---------------------------------------------------------------------------
# Pure-JAX reference (mirrors the PyTorch forward exactly, f32)
# ---------------------------------------------------------------------------
def mlp_decoder_reference(params, xs):
    n, _, h0, w0 = xs[0].shape
    feats = []
    for k, x in enumerate(xs):
        _, c, h, w = x.shape
        x_flat = jnp.transpose(x, (0, 2, 3, 1)).reshape(n, h * w, c)
        y = x_flat @ params["fc_w"][k].T + params["fc_b"][k]
        y = y.reshape(n, h, w, EMBED_DIM)
        mh = bilinear_matrix(h0, h)
        mw = bilinear_matrix(w0, w)
        y = jnp.einsum("oh,nhwc,pw->nopc", mh, y, mw)
        feats.append(y)
    cat = jnp.concatenate(feats, axis=-1)                     # (n, h0, w0, 512)
    fused = cat @ params["fuse_w"].T + params["fuse_b"]
    z = fused @ params["pred_w"].T + params["pred_b"]
    out = jax.nn.sigmoid(z)
    return jnp.transpose(out, (0, 3, 1, 2))


if __name__ == "__main__":
    key = jax.random.PRNGKey(0)
    nb_filter = [4, 8]            # two pyramid levels
    N = 2
    spatial = [(16, 16), (8, 8)]  # level 0 defines the output resolution

    key, kp = jax.random.split(key)
    params = init_params(kp, nb_filter)

    xs = []
    for c, (h, w) in zip(nb_filter, spatial):
        key, kx = jax.random.split(key)
        xs.append(jax.random.normal(kx, (N, c, h, w), jnp.float32))

    out = jax.block_until_ready(mlp_decoder_forward(params, xs))
    assert out.shape == (N, NUM_CLASSES, 16, 16)
    assert bool(jnp.all(jnp.isfinite(out)))

    ref = jax.block_until_ready(mlp_decoder_reference(params, xs))
    max_err = float(jnp.max(jnp.abs(out - ref)))
    assert max_err < 2e-2, f"mismatch vs reference: max abs err {max_err}"

    print("KERNEL_OK")
</pallas_src>

<mosaic_0001>
module attributes {stable_mosaic.version = 11 : i64} {
  func.func @_decoder_head_kernel(%arg0: i32, %arg1: memref<12x256xbf16, #tpu.memory_space<vmem>>, %arg2: memref<256x12xbf16, #tpu.memory_space<vmem>>, %arg3: memref<256x1xf32, #tpu.memory_space<vmem>>, %arg4: memref<8x256xbf16, #tpu.memory_space<vmem>>, %arg5: memref<8x1xf32, #tpu.memory_space<vmem>>, %arg6: memref<8x256xf32, #tpu.memory_space<vmem>>) attributes {dimension_semantics = [#tpu.dimension_semantics<parallel>], iteration_bounds = array<i64: 2>, scalar_prefetch = 0 : i64, scratch_operands = 0 : i64, tpu.core_type = #tpu.core_type<tc>, window_params = [{transform_indices = @transform_0, window_bounds = array<i64: 12, 256>}, {pipeline_mode = #tpu.pipeline_mode<synchronous>, transform_indices = @transform_1, window_bounds = array<i64: 256, 12>}, {pipeline_mode = #tpu.pipeline_mode<synchronous>, transform_indices = @transform_2, window_bounds = array<i64: 256, 1>}, {pipeline_mode = #tpu.pipeline_mode<synchronous>, transform_indices = @transform_3, window_bounds = array<i64: 8, 256>}, {pipeline_mode = #tpu.pipeline_mode<synchronous>, transform_indices = @transform_4, window_bounds = array<i64: 8, 1>}, {transform_indices = @transform_5, window_bounds = array<i64: 8, 256>}]} {
    %c0 = arith.constant 0 : index
    %c0_0 = arith.constant 0 : index
    %0 = vector.load %arg2[%c0, %c0_0] : memref<256x12xbf16, #tpu.memory_space<vmem>>, vector<256x12xbf16>
    %c0_1 = arith.constant 0 : index
    %c0_2 = arith.constant 0 : index
    %1 = vector.load %arg1[%c0_1, %c0_2] : memref<12x256xbf16, #tpu.memory_space<vmem>>, vector<12x256xbf16>
    %cst = arith.constant dense<0.000000e+00> : vector<256x256xf32>
    %2 = tpu.matmul %0, %1, %cst {dimension_numbers = #tpu.dot_dimension_numbers<[1], [0], [0], [1], [0, 0, 1, 1], [], []>} : vector<256x12xbf16>, vector<12x256xbf16>, vector<256x256xf32> -> vector<256x256xf32>
    %c0_3 = arith.constant 0 : index
    %c0_4 = arith.constant 0 : index
    %3 = vector.load %arg3[%c0_3, %c0_4] : memref<256x1xf32, #tpu.memory_space<vmem>>, vector<256x1xf32>
    %4 = vector.broadcast %3 : vector<256x1xf32> to vector<256x256xf32>
    %5 = arith.addf %2, %4 : vector<256x256xf32>
    %c0_5 = arith.constant 0 : index
    %c0_6 = arith.constant 0 : index
    %6 = vector.load %arg4[%c0_5, %c0_6] : memref<8x256xbf16, #tpu.memory_space<vmem>>, vector<8x256xbf16>
    %7 = arith.truncf %5 : vector<256x256xf32> to vector<256x256xbf16>
    %cst_7 = arith.constant dense<0.000000e+00> : vector<8x256xf32>
    %8 = tpu.matmul %6, %7, %cst_7 {dimension_numbers = #tpu.dot_dimension_numbers<[1], [0], [0], [1], [0, 0, 1, 1], [], []>} : vector<8x256xbf16>, vector<256x256xbf16>, vector<8x256xf32> -> vector<8x256xf32>
    %c0_8 = arith.constant 0 : index
    %c0_9 = arith.constant 0 : index
    %9 = vector.load %arg5[%c0_8, %c0_9] : memref<8x1xf32, #tpu.memory_space<vmem>>, vector<8x1xf32>
    %10 = vector.broadcast %9 : vector<8x1xf32> to vector<8x256xf32>
    %11 = arith.addf %8, %10 : vector<8x256xf32>
    %cst_10 = arith.constant 0.000000e+00 : f32
    %12 = vector.broadcast %cst_10 : f32 to vector<8x256xf32>
    %13 = arith.subf %12, %11 : vector<8x256xf32>
    %14 = math.exp %13 : vector<8x256xf32>
    %cst_11 = arith.constant 1.000000e+00 : f32
    %15 = vector.broadcast %cst_11 : f32 to vector<8x256xf32>
    %16 = arith.addf %15, %14 : vector<8x256xf32>
    %17 = tpu.reciprocal %16 {approx = true} : vector<8x256xf32> -> vector<8x256xf32>
    %c0_12 = arith.constant 0 : index
    %c0_13 = arith.constant 0 : index
    %18 = vector.load %arg6[%c0_12, %c0_13] : memref<8x256xf32, #tpu.memory_space<vmem>>, vector<8x256xf32>
    tpu.vector_store %arg6[%c0_12, %c0_13], %17 {strides = array<i32>} : memref<8x256xf32, #tpu.memory_space<vmem>>, vector<8x256xf32>,
    return
  }
  func.func @transform_0(%arg0: i32) -> (i32, i32) {
    %c0_i32 = arith.constant 0 : i32
    %c0_i32_0 = arith.constant 0 : i32
    return %c0_i32, %arg0 : i32, i32
  }
  func.func @transform_1(%arg0: i32) -> (i32, i32) {
    %c0_i32 = arith.constant 0 : i32
    %c0_i32_0 = arith.constant 0 : i32
    %c0_i32_1 = arith.constant 0 : i32
    return %c0_i32, %c0_i32_0 : i32, i32
  }
  func.func @transform_2(%arg0: i32) -> (i32, i32) {
    %c0_i32 = arith.constant 0 : i32
    %c0_i32_0 = arith.constant 0 : i32
    %c0_i32_1 = arith.constant 0 : i32
    return %c0_i32, %c0_i32_0 : i32, i32
  }
  func.func @transform_3(%arg0: i32) -> (i32, i32) {
    %c0_i32 = arith.constant 0 : i32
    %c0_i32_0 = arith.constant 0 : i32
    %c0_i32_1 = arith.constant 0 : i32
    return %c0_i32, %c0_i32_0 : i32, i32
  }
  func.func @transform_4(%arg0: i32) -> (i32, i32) {
    %c0_i32 = arith.constant 0 : i32
    %c0_i32_0 = arith.constant 0 : i32
    %c0_i32_1 = arith.constant 0 : i32
    return %c0_i32, %c0_i32_0 : i32, i32
  }
  func.func @transform_5(%arg0: i32) -> (i32, i32) {
    %c0_i32 = arith.constant 0 : i32
    %c0_i32_0 = arith.constant 0 : i32
    return %c0_i32, %arg0 : i32, i32
  }
}

</mosaic_0001>

<llo_original>
// kernel: tpu_custom_call.1
$region0: #{tpu_custom_call.1}
  #allocation0 [shape = 'u32[]', space=smem, size = 0x4, offset = 0x4, fixed_abs, tag = 'smem constant byte address 0x4 - core index']
  #allocation1 [shape = 'u32[72,128]{1,0:T(1,128)}', space=vmem, size = 0x9000, scoped, tag = 'internal scratch']
  %s0 = inlined_call_operand.vmem [shape: bf16[12,512], index: 0, kind: input, shape index: {}]
  %s1 = inlined_call_operand.vmem [shape: bf16[256,12], index: 1, kind: input, shape index: {}]
  %s2 = inlined_call_operand.vmem [shape: f32[256,1], index: 2, kind: input, shape index: {}]
  %s3 = inlined_call_operand.vmem [shape: bf16[8,256], index: 3, kind: input, shape index: {}]
  %s4 = inlined_call_operand.vmem [shape: f32[8,1], index: 4, kind: input, shape index: {}]
  %s5 = inlined_call_operand.hbm [shape: f32[8,512], index: 5, kind: output, shape index: {}]
  %s6 = sld [smem:[#allocation0]]
  $region91: #{tpu_custom_call.1} parent=0
    _
  %s8 = ssub.s32 1, %s6
  %s9 = scalar_select 0, %s8, %s6
  $region1: #{tpu_custom_call.1} parent=0
    #allocation2 [shape = 'u8[16384]{0}', space=vmem, size = 0x4000, scoped, tag = 'input window, operand 0']
    #allocation3 [shape = 'u8[16384]{0}', space=vmem, size = 0x4000, scoped, tag = 'output window, operand 0']
    #allocation4 [shape = 's32[2]{0}', space=sflag, size = 0x8, scoped, tag = 'scoped memory for tpu_custom_call.1']
    %10 = vsyncpa [#allocation4], 0
    %s11 = scalar_lea.sflag [#allocation4], 1
    %12 = vsyncpa %s11, 0
    loop: start=0, step=1, limit=4
    $region2: #{tpu_custom_call.1} parent=1 // loop_pre_header
      _
    $region3: #{tpu_custom_call.1} parent=1 // loop_header
      %s14 = sphi 0, %s18
      %p15 = scmp.ge.s32.totalorder %s14, 4
      %s24 = sphi 0, %s26
      %s27 = sphi 0, %s24
      %s28 = sphi 0, %s27
      %s44 = sphi 0, %s28
      %s48 = sphi 0, %s48
      %s50 = sphi 0, %s48
      %s51 = sphi 0, %s50
      %s65 = sphi 0, %s51
      %s69 = sphi 0, %s69
      %s71 = sphi 0, %s69
      %s72 = sphi 0, %s71
      %s86 = sphi 0, %s72
      %s90 = sphi 0, %s90
      %s92 = sphi 0, %s90
      %s93 = sphi 0, %s92
      %s107 = sphi 0, %s93
      %s111 = sphi 0, %s111
      %s113 = sphi 0, %s111
      %s114 = sphi 0, %s113
      %s128 = sphi 0, %s114
      %s134 = sphi 0, %s136
      %s137 = sphi 0, %s134
      %s138 = sphi 0, %s137
      %s154 = sphi 0, %s138
    $region4: #{tpu_custom_call.1} parent=1 // loop_header_branch
      %17 = sbr.rel (%p15) target = $region8
    $region5: #{tpu_custom_call.1} parent=1 // loop_body
      %s19 = ssub.s32 %s14, 1
      %s20 = ssub.s32 %s14, 2
      %s21 = sadd.s32 %s14, 1
      %s22 = ssub.s32 %s14, %s21
      %p23 = scmp.eq.s32.totalorder %s22, 0
      %s25 = sadd.s32 %s24, 1
      %s26 = scalar_select %p23, %s24, %s25
      %p29 = pneg %p23
      %p30 = scmp.eq.s32.totalorder %s14, 1
      %p31 = por %p29, %p30
      %p32 = scmp.ne.s32.totalorder %s24, %s27
      %p33 = scmp.eq.s32.totalorder %s14, 0
      %p34 = por %p32, %p33
      %p35 = scmp.ne.s32.totalorder %s24, %s27
      %p36 = scmp.eq.s32.totalorder %s19, 1
      %p37 = por %p35, %p36
      %p38 = scmp.ne.s32.totalorder %s27, %s28
      %p39 = scmp.eq.s32.totalorder %s19, 0
      %p40 = por %p38, %p39
      %p41 = scmp.ne.s32.totalorder %s27, %s28
      %p42 = scmp.eq.s32.totalorder %s20, 1
      %p43 = por %p41, %p42
      %p45 = scmp.ne.s32.totalorder %s28, %s44
      %p46 = scmp.eq.s32.totalorder %s20, 0
      %p47 = por %p45, %p46
      %s49 = sadd.s32 %s48, 1
      %p52 = scmp.eq.s32.totalorder %s14, 1
      %p53 = scmp.ne.s32.totalorder %s48, %s50
      %p54 = scmp.eq.s32.totalorder %s14, 0
      %p55 = por %p53, %p54
      %p56 = scmp.ne.s32.totalorder %s48, %s50
      %p57 = scmp.eq.s32.totalorder %s19, 1
      %p58 = por %p56, %p57
      %p59 = scmp.ne.s32.totalorder %s50, %s51
      %p60 = scmp.eq.s32.totalorder %s19, 0
      %p61 = por %p59, %p60
      %p62 = scmp.ne.s32.totalorder %s50, %s51
      %p63 = scmp.eq.s32.totalorder %s20, 1
      %p64 = por %p62, %p63
      %p66 = scmp.ne.s32.totalorder %s51, %s65
      %p67 = scmp.eq.s32.totalorder %s20, 0
      %p68 = por %p66, %p67
      %s70 = sadd.s32 %s69, 1
      %p73 = scmp.eq.s32.totalorder %s14, 1
      %p74 = scmp.ne.s32.totalorder %s69, %s71
      %p75 = scmp.eq.s32.totalorder %s14, 0
      %p76 = por %p74, %p75
      %p77 = scmp.ne.s32.totalorder %s69, %s71
      %p78 = scmp.eq.s32.totalorder %s19, 1
      %p79 = por %p77, %p78
      %p80 = scmp.ne.s32.totalorder %s71, %s72
      %p81 = scmp.eq.s32.totalorder %s19, 0
      %p82 = por %p80, %p81
      %p83 = scmp.ne.s32.totalorder %s71, %s72
      %p84 = scmp.eq.s32.totalorder %s20, 1
      %p85 = por %p83, %p84
      %p87 = scmp.ne.s32.totalorder %s72, %s86
      %p88 = scmp.eq.s32.totalorder %s20, 0
      %p89 = por %p87, %p88
      %s91 = sadd.s32 %s90, 1
      %p94 = scmp.eq.s32.totalorder %s14, 1
      %p95 = scmp.ne.s32.totalorder %s90, %s92
      %p96 = scmp.eq.s32.totalorder %s14, 0
      %p97 = por %p95, %p96
      %p98 = scmp.ne.s32.totalorder %s90, %s92
      %p99 = scmp.eq.s32.totalorder %s19, 1
      %p100 = por %p98, %p99
      %p101 = scmp.ne.s32.totalorder %s92, %s93
      %p102 = scmp.eq.s32.totalorder %s19, 0
      %p103 = por %p101, %p102
      %p104 = scmp.ne.s32.totalorder %s92, %s93
      %p105 = scmp.eq.s32.totalorder %s20, 1
      %p106 = por %p104, %p105
      %p108 = scmp.ne.s32.totalorder %s93, %s107
      %p109 = scmp.eq.s32.totalorder %s20, 0
      %p110 = por %p108, %p109
      %s112 = sadd.s32 %s111, 1
      %p115 = scmp.eq.s32.totalorder %s14, 1
      %p116 = scmp.ne.s32.totalorder %s111, %s113
      %p117 = scmp.eq.s32.totalorder %s14, 0
      %p118 = por %p116, %p117
      %p119 = scmp.ne.s32.totalorder %s111, %s113
      %p120 = scmp.eq.s32.totalorder %s19, 1
      %p121 = por %p119, %p120
      %p122 = scmp.ne.s32.totalorder %s113, %s114
      %p123 = scmp.eq.s32.totalorder %s19, 0
      %p124 = por %p122, %p123
      %p125 = scmp.ne.s32.totalorder %s113, %s114
      %p126 = scmp.eq.s32.totalorder %s20, 1
      %p127 = por %p125, %p126
      %p129 = scmp.ne.s32.totalorder %s114, %s128
      %p130 = scmp.eq.s32.totalorder %s20, 0
      %p131 = por %p129, %p130
      %s132 = ssub.s32 %s14, %s21
      %p133 = scmp.eq.s32.totalorder %s132, 0
      %s135 = sadd.s32 %s134, 1
      %s136 = scalar_select %p133, %s134, %s135
      %p139 = pneg %p133
      %p140 = scmp.eq.s32.totalorder %s14, 1
      %p141 = por %p139, %p140
      %p142 = scmp.ne.s32.totalorder %s134, %s137
      %p143 = scmp.eq.s32.totalorder %s14, 0
      %p144 = por %p142, %p143
      %p145 = scmp.ne.s32.totalorder %s134, %s137
      %p146 = scmp.eq.s32.totalorder %s19, 1
      %p147 = por %p145, %p146
      %p148 = scmp.ne.s32.totalorder %s137, %s138
      %p149 = scmp.eq.s32.totalorder %s19, 0
      %p150 = por %p148, %p149
      %p151 = scmp.ne.s32.totalorder %s137, %s138
      %p152 = scmp.eq.s32.totalorder %s20, 1
      %p153 = por %p151, %p152
      %p155 = scmp.ne.s32.totalorder %s138, %s154
      %p156 = scmp.eq.s32.totalorder %s20, 0
      %p157 = por %p155, %p156
      %p158 = scmp.le.s32.totalorder 1, %s14
      %p159 = scmp.lt.s32.totalorder %s14, 3
      %p160 = pnand %p158, %p159
      %p161 = pneg %p160
      // Predicated region
      $region9: #{tpu_custom_call.1} parent=5 // pred_check
        _
      $region10: #{tpu_custom_call.1} parent=5 // pred_check_branch
        %163 = sbr.rel (%p160) target = $region12
      $region11: #{tpu_custom_call.1} parent=5 // pred_region
        %s164 = ssub.s32 %s14, 1
        // Predicated region
        $region13: #{tpu_custom_call.1} parent=11 // pred_check
          %p165 = pneg %p61
        $region14: #{tpu_custom_call.1} parent=11 // pred_check_branch
          %167 = sbr.rel (%p165) target = $region16
        $region15: #{tpu_custom_call.1} parent=11 // pred_region
          _
        $region16: #{tpu_custom_call.1} parent=11 // pred_fallthru
          _
        // Predicated region
        $region17: #{tpu_custom_call.1} parent=11 // pred_check
          %p168 = pneg %p82
        $region18: #{tpu_custom_call.1} parent=11 // pred_check_branch
          %170 = sbr.rel (%p168) target = $region20
        $region19: #{tpu_custom_call.1} parent=11 // pred_region
          _
        $region20: #{tpu_custom_call.1} parent=11 // pred_fallthru
          _
        // Predicated region
        $region21: #{tpu_custom_call.1} parent=11 // pred_check
          %p171 = pneg %p103
        $region22: #{tpu_custom_call.1} parent=11 // pred_check_branch
          %173 = sbr.rel (%p171) target = $region24
        $region23: #{tpu_custom_call.1} parent=11 // pred_region
          _
        $region24: #{tpu_custom_call.1} parent=11 // pred_fallthru
          _
        // Predicated region
        $region25: #{tpu_custom_call.1} parent=11 // pred_check
          %p174 = pneg %p124
        $region26: #{tpu_custom_call.1} parent=11 // pred_check_branch
          %176 = sbr.rel (%p174) target = $region28
        $region27: #{tpu_custom_call.1} parent=11 // pred_region
          _
        $region28: #{tpu_custom_call.1} parent=11 // pred_fallthru
          _
      $region12: #{tpu_custom_call.1} parent=5 // pred_fallthru
        _
      %p177 = scmp.lt.s32.totalorder %s14, 2
      // Predicated region
      $region29: #{tpu_custom_call.1} parent=5 // pred_check
        %p178 = pneg %p177
      $region30: #{tpu_custom_call.1} parent=5 // pred_check_branch
        %180 = sbr.rel (%p178) target = $region32
      $region31: #{tpu_custom_call.1} parent=5 // pred_region
        // Predicated region
        $region33: #{tpu_custom_call.1} parent=31 // pred_check
          %p181 = pneg %p34
        $region34: #{tpu_custom_call.1} parent=31 // pred_check_branch
          %183 = sbr.rel (%p181) target = $region36
        $region35: #{tpu_custom_call.1} parent=31 // pred_region
          %s184 = sand.u32 %s24, 1
          %s185 = sand.u32 %s24, 1
          %s186 = smul.addr %s185, 16
          %s187 = scalar_lea.vmem [#allocation2], %s186
          %s188 = smul.u32 2, %s14
          %s189 = smul.addr %s188, 4
          %s190 = scalar_lea.vmem %s0, %s189
          // Predicated region
          $region37: #{tpu_custom_call.1} parent=35 // pred_check
            _
          $region38: #{tpu_custom_call.1} parent=35 // pred_check_branch
            %192 = sbr.rel (0) target = $region40
          $region39: #{tpu_custom_call.1} parent=35 // pred_region
            // Predicated region
            $region41: #{tpu_custom_call.1} parent=39 // pred_check
              _
            $region42: #{tpu_custom_call.1} parent=39 // pred_check_branch
              %194 = sbr.rel (0) target = $region44
            $region43: #{tpu_custom_call.1} parent=39 // pred_region
              // Predicated region
              $region56: #{tpu_custom_call.1} parent=43 // pred_check
                _
              $region57: #{tpu_custom_call.1} parent=43 // pred_check_branch
                %212 = sbr.rel (0) target = $region59
              $region58: #{tpu_custom_call.1} parent=43 // pred_region
                loop: start=0, step=1, limit=1
                $region60: #{tpu_custom_call.1} parent=58 // loop_pre_header
                  _
                $region61: #{tpu_custom_call.1} parent=58 // loop_header
                  %s214 = sphi 0, %s218
                  %p215 = scmp.ge.s32.totalorder %s214, 1
                  %s219 = sphi %s190, %s190
                  %s220 = sphi %s187, %s187
                $region62: #{tpu_custom_call.1} parent=58 // loop_header_branch
                  %217 = sbr.rel (%p215) target = $region66
                $region63: #{tpu_custom_call.1} parent=58 // loop_body
                  %v221 = vld [vmem:[%s219] sm:$0xff]
                  %222 = vst [vmem:[%s220] sm:$0xff] %v221
                  %v223 = vld [vmem:[%s219 + $0x10] sm:$0xff]
                  %224 = vst [vmem:[%s220 + $0x8] sm:$0xff] %v223
                $region64: #{tpu_custom_call.1} parent=58 // loop_footer
                  %s218 = sadd.s32 1, %s214
                $region65: #{tpu_custom_call.1} parent=58 // loop_footer_branch
                  %213 = sbr.rel target = $region61
                $region66: #{tpu_custom_call.1} parent=58 // loop_exit
                  _
              $region59: #{tpu_custom_call.1} parent=43 // pred_fallthru
                _
              // Predicated region
              $region67: #{tpu_custom_call.1} parent=43 // pred_check
                _
              $region68: #{tpu_custom_call.1} parent=43 // pred_check_branch
                %226 = sbr.rel target = $region70
              $region69: #{tpu_custom_call.1} parent=43 // pred_region
                _
              $region70: #{tpu_custom_call.1} parent=43 // pred_fallthru
                _
            $region44: #{tpu_custom_call.1} parent=39 // pred_fallthru
              _
            // Predicated region
            $region45: #{tpu_custom_call.1} parent=39 // pred_check
              _
            $region46: #{tpu_custom_call.1} parent=39 // pred_check_branch
              %196 = sbr.rel target = $region48
            $region47: #{tpu_custom_call.1} parent=39 // pred_region
              %s198 = ssub.s32 256, 1
              loop: start=0, step=1, limit=1
              $region49: #{tpu_custom_call.1} parent=47 // loop_pre_header
                _
              $region50: #{tpu_custom_call.1} parent=47 // loop_header
                %s200 = sphi 0, %s204
                %p201 = scmp.ge.s32.totalorder %s200, 1
                %s205 = sphi %s190, %s190
                %s206 = sphi %s187, %s187
              $region51: #{tpu_custom_call.1} parent=47 // loop_header_branch
                %203 = sbr.rel (%p201) target = $region55
              $region52: #{tpu_custom_call.1} parent=47 // loop_body
                %v207 = vld [vmem:[%s205] sm:%s198]
                %208 = vst [vmem:[%s206] sm:%s198] %v207
                %v209 = vld [vmem:[%s205 + $0x10] sm:%s198]
                %210 = vst [vmem:[%s206 + $0x8] sm:%s198] %v209
              $region53: #{tpu_custom_call.1} parent=47 // loop_footer
                %s204 = sadd.s32 1, %s200
              $region54: #{tpu_custom_call.1} parent=47 // loop_footer_branch
                %199 = sbr.rel target = $region50
              $region55: #{tpu_custom_call.1} parent=47 // loop_exit
                _
            $region48: #{tpu_custom_call.1} parent=39 // pred_fallthru
              _
          $region40: #{tpu_custom_call.1} parent=35 // pred_fallthru
            _
          %227 = vnop
        $region36: #{tpu_custom_call.1} parent=31 // pred_fallthru
          _
      $region32: #{tpu_custom_call.1} parent=5 // pred_fallthru
        _
      %p228 = scmp.le.s32.totalorder 1, %s14
      %p229 = scmp.lt.s32.totalorder %s14, 3
      %p230 = pnand %p228, %p229
      %p231 = pneg %p230
      // Predicated region
      $region71: #{tpu_custom_call.1} parent=5 // pred_check
        _
      $region72: #{tpu_custom_call.1} parent=5 // pred_check_branch
        %233 = sbr.rel (%p230) target = $region74
      $region73: #{tpu_custom_call.1} parent=5 // pred_region
        %s234 = ssub.s32 %s14, 1
        %s235 = sand.u32 %s27, 1
        %s236 = sand.u32 %s27, 1
        %s237 = smul.addr %s236, 16
        %s238 = scalar_lea.vmem [#allocation2], %s237
        // Predicated region
        $region75: #{tpu_custom_call.1} parent=73 // pred_check
          %p239 = pneg %p40
        $region76: #{tpu_custom_call.1} parent=73 // pred_check_branch
          %241 = sbr.rel (%p239) target = $region78
        $region77: #{tpu_custom_call.1} parent=73 // pred_region
          _
        $region78: #{tpu_custom_call.1} parent=73 // pred_fallthru
          _
        %s242 = sand.u32 %s27, 1
        %s243 = sand.u32 %s27, 1
        %s244 = smul.addr %s243, 16
        %s245 = scalar_lea.vmem [#allocation2], %s244
        %p246 = pneg %p40
        %p247 = pneg %p37
        %p248 = pneg %p61
        %p249 = pneg %p58
        %p250 = pneg %p82
        %p251 = pneg %p79
        %p252 = pneg %p103
        %p253 = pneg %p100
        %p254 = pneg %p124
        %p255 = pneg %p121
        %p256 = pneg %p150
        %p257 = pneg %p147
        %s258 = sand.u32 %s137, 1
        %s259 = scalar_lea.sflag [#allocation4], %s258
        %s260 = sand.u32 %s137, 1
        %s261 = smul.addr %s260, 16
        %s262 = scalar_lea.vmem [#allocation3], %s261
        %s263 = smul.u32 2, %s19
        %s264 = smul.u32 2, %s19
        %v266 = vld [vmem:[%s1] sm:$0xf]
        %v267 = vld [vmem:[%s1 + $0x4] sm:$0xf]
        %v268 = vld [vmem:[%s1 + $0x8] sm:$0xf]
        %v269 = vld [vmem:[%s1 + $0xc] sm:$0xf]
        %v270 = vld [vmem:[%s1 + $0x10] sm:$0xf]
        %v271 = vld [vmem:[%s1 + $0x14] sm:$0xf]
        %v272 = vld [vmem:[%s1 + $0x18] sm:$0xf]
        %v273 = vld [vmem:[%s1 + $0x1c] sm:$0xf]
        %v274 = vld [vmem:[%s1 + $0x20] sm:$0xf]
        %v275 = vld [vmem:[%s1 + $0x24] sm:$0xf]
        %v276 = vld [vmem:[%s1 + $0x28] sm:$0xf]
        %v277 = vld [vmem:[%s1 + $0x2c] sm:$0xf]
        %v278 = vld [vmem:[%s1 + $0x30] sm:$0xf]
        %v279 = vld [vmem:[%s1 + $0x34] sm:$0xf]
        %v280 = vld [vmem:[%s1 + $0x38] sm:$0xf]
        %v281 = vld [vmem:[%s1 + $0x3c] sm:$0xf]
        %v282 = vld [vmem:[%s1 + $0x40] sm:$0xf]
        %v283 = vld [vmem:[%s1 + $0x44] sm:$0xf]
        %v284 = vld [vmem:[%s1 + $0x48] sm:$0xf]
        %v285 = vld [vmem:[%s1 + $0x4c] sm:$0xf]
        %v286 = vld [vmem:[%s1 + $0x50] sm:$0xf]
        %v287 = vld [vmem:[%s1 + $0x54] sm:$0xf]
        %v288 = vld [vmem:[%s1 + $0x58] sm:$0xf]
        %v289 = vld [vmem:[%s1 + $0x5c] sm:$0xf]
        %v290 = vld [vmem:[%s1 + $0x60] sm:$0xf]
        %v291 = vld [vmem:[%s1 + $0x64] sm:$0xf]
        %v292 = vld [vmem:[%s1 + $0x68] sm:$0xf]
        %v293 = vld [vmem:[%s1 + $0x6c] sm:$0xf]
        %v294 = vld [vmem:[%s1 + $0x70] sm:$0xf]
        %v295 = vld [vmem:[%s1 + $0x74] sm:$0xf]
        %v296 = vld [vmem:[%s1 + $0x78] sm:$0xf]
        %v297 = vld [vmem:[%s1 + $0x7c] sm:$0xf]
        %v298 = vld [vmem:[%s238] sm:$0xff]
        %v299 = vld [vmem:[%s238 + $0x8] sm:$0x33]
        %v300 = vld [vmem:[%s2] sm:$0xff]
        %v301 = vld [vmem:[%s2 + $0x8] sm:$0xff]
        %v302 = vld [vmem:[%s2 + $0x10] sm:$0xff]
        %v303 = vld [vmem:[%s2 + $0x18] sm:$0xff]
        %v304 = vld [vmem:[%s2 + $0x20] sm:$0xff]
        %v305 = vld [vmem:[%s2 + $0x28] sm:$0xff]
        %v306 = vld [vmem:[%s2 + $0x30] sm:$0xff]
        %v307 = vld [vmem:[%s2 + $0x38] sm:$0xff]
        %v308 = vld [vmem:[%s2 + $0x40] sm:$0xff]
        %v309 = vld [vmem:[%s2 + $0x48] sm:$0xff]
        %v310 = vld [vmem:[%s2 + $0x50] sm:$0xff]
        %v311 = vld [vmem:[%s2 + $0x58] sm:$0xff]
        %v312 = vld [vmem:[%s2 + $0x60] sm:$0xff]
        %v313 = vld [vmem:[%s2 + $0x68] sm:$0xff]
        %v314 = vld [vmem:[%s2 + $0x70] sm:$0xff]
        %v315 = vld [vmem:[%s2 + $0x78] sm:$0xff]
        %v316 = vld [vmem:[%s2 + $0x80] sm:$0xff]
        %v317 = vld [vmem:[%s2 + $0x88] sm:$0xff]
        %v318 = vld [vmem:[%s2 + $0x90] sm:$0xff]
        %v319 = vld [vmem:[%s2 + $0x98] sm:$0xff]
        %v320 = vld [vmem:[%s2 + $0xa0] sm:$0xff]
        %v321 = vld [vmem:[%s2 + $0xa8] sm:$0xff]
        %v322 = vld [vmem:[%s2 + $0xb0] sm:$0xff]
        %v323 = vld [vmem:[%s2 + $0xb8] sm:$0xff]
        %v324 = vld [vmem:[%s2 + $0xc0] sm:$0xff]
        %v325 = vld [vmem:[%s2 + $0xc8] sm:$0xff]
        %v326 = vld [vmem:[%s2 + $0xd0] sm:$0xff]
        %v327 = vld [vmem:[%s2 + $0xd8] sm:$0xff]
        %v328 = vld [vmem:[%s2 + $0xe0] sm:$0xff]
        %v329 = vld [vmem:[%s2 + $0xe8] sm:$0xff]
        %v330 = vld [vmem:[%s2 + $0xf0] sm:$0xff]
        %v331 = vld [vmem:[%s2 + $0xf8] sm:$0xff]
        %333 = vset.pattern.permute.xlu0 0
        %334 = vperm.xlu0 %333, %v300
        %v335 = vpop.permute.xlu0 %334
        %338 = vset.pattern.permute.xlu0 0
        %339 = vperm.xlu0 %338, %v301
        %v340 = vpop.permute.xlu0 %339
        %343 = vset.pattern.permute.xlu0 0
        %344 = vperm.xlu0 %343, %v302
        %v345 = vpop.permute.xlu0 %344
        %348 = vset.pattern.permute.xlu0 0
        %349 = vperm.xlu0 %348, %v303
        %v350 = vpop.permute.xlu0 %349
        %353 = vset.pattern.permute.xlu0 0
        %354 = vperm.xlu0 %353, %v304
        %v355 = vpop.permute.xlu0 %354
        %358 = vset.pattern.permute.xlu0 0
        %359 = vperm.xlu0 %358, %v305
        %v360 = vpop.permute.xlu0 %359
        %363 = vset.pattern.permute.xlu0 0
        %364 = vperm.xlu0 %363, %v306
        %v365 = vpop.permute.xlu0 %364
        %368 = vset.pattern.permute.xlu0 0
        %369 = vperm.xlu0 %368, %v307
        %v370 = vpop.permute.xlu0 %369
        %373 = vset.pattern.permute.xlu0 0
        %374 = vperm.xlu0 %373, %v308
        %v375 = vpop.permute.xlu0 %374
        %378 = vset.pattern.permute.xlu0 0
        %379 = vperm.xlu0 %378, %v309
        %v380 = vpop.permute.xlu0 %379
        %383 = vset.pattern.permute.xlu0 0
        %384 = vperm.xlu0 %383, %v310
        %v385 = vpop.permute.xlu0 %384
        %388 = vset.pattern.permute.xlu0 0
        %389 = vperm.xlu0 %388, %v311
        %v390 = vpop.permute.xlu0 %389
        %393 = vset.pattern.permute.xlu0 0
        %394 = vperm.xlu0 %393, %v312
        %v395 = vpop.permute.xlu0 %394
        %398 = vset.pattern.permute.xlu0 0
        %399 = vperm.xlu0 %398, %v313
        %v400 = vpop.permute.xlu0 %399
        %403 = vset.pattern.permute.xlu0 0
        %404 = vperm.xlu0 %403, %v314
        %v405 = vpop.permute.xlu0 %404
        %408 = vset.pattern.permute.xlu0 0
        %409 = vperm.xlu0 %408, %v315
        %v410 = vpop.permute.xlu0 %409
        %413 = vset.pattern.permute.xlu0 0
        %414 = vperm.xlu0 %413, %v316
        %v415 = vpop.permute.xlu0 %414
        %418 = vset.pattern.permute.xlu0 0
        %419 = vperm.xlu0 %418, %v317
        %v420 = vpop.permute.xlu0 %419
        %423 = vset.pattern.permute.xlu0 0
        %424 = vperm.xlu0 %423, %v318
        %v425 = vpop.permute.xlu0 %424
        %428 = vset.pattern.permute.xlu0 0
        %429 = vperm.xlu0 %428, %v319
        %v430 = vpop.permute.xlu0 %429
        %433 = vset.pattern.permute.xlu0 0
        %434 = vperm.xlu0 %433, %v320
        %v435 = vpop.permute.xlu0 %434
        %438 = vset.pattern.permute.xlu0 0
        %439 = vperm.xlu0 %438, %v321
        %v440 = vpop.permute.xlu0 %439
        %443 = vset.pattern.permute.xlu0 0
        %444 = vperm.xlu0 %443, %v322
        %v445 = vpop.permute.xlu0 %444
        %448 = vset.pattern.permute.xlu0 0
        %449 = vperm.xlu0 %448, %v323
        %v450 = vpop.permute.xlu0 %449
        %453 = vset.pattern.permute.xlu0 0
        %454 = vperm.xlu0 %453, %v324
        %v455 = vpop.permute.xlu0 %454
        %458 = vset.pattern.permute.xlu0 0
        %459 = vperm.xlu0 %458, %v325
        %v460 = vpop.permute.xlu0 %459
        %463 = vset.pattern.permute.xlu0 0
        %464 = vperm.xlu0 %463, %v326
        %v465 = vpop.permute.xlu0 %464
        %468 = vset.pattern.permute.xlu0 0
        %469 = vperm.xlu0 %468, %v327
        %v470 = vpop.permute.xlu0 %469
        %473 = vset.pattern.permute.xlu0 0
        %474 = vperm.xlu0 %473, %v328
        %v475 = vpop.permute.xlu0 %474
        %478 = vset.pattern.permute.xlu0 0
        %479 = vperm.xlu0 %478, %v329
        %v480 = vpop.permute.xlu0 %479
        %483 = vset.pattern.permute.xlu0 0
        %484 = vperm.xlu0 %483, %v330
        %v485 = vpop.permute.xlu0 %484
        %488 = vset.pattern.permute.xlu0 0
        %489 = vperm.xlu0 %488, %v331
        %v490 = vpop.permute.xlu0 %489
        %v524 = vunpack.c.l.b16 %v266
        %v525 = vunpack.c.l.b16 %v267
        %v526 = vunpack.c.l.b16 %v268
        %v527 = vunpack.c.l.b16 %v269
        %v528 = vunpack.c.l.b16 %v270
        %v529 = vunpack.c.l.b16 %v271
        %v530 = vunpack.c.l.b16 %v272
        %v531 = vunpack.c.l.b16 %v273
        %v532 = vunpack.c.l.b16 %v274
        %v533 = vunpack.c.l.b16 %v275
        %v534 = vunpack.c.l.b16 %v276
        %v535 = vunpack.c.l.b16 %v277
        %v536 = vunpack.c.l.b16 %v278
        %v537 = vunpack.c.l.b16 %v279
        %v538 = vunpack.c.l.b16 %v280
        %v539 = vunpack.c.l.b16 %v281
        %v540 = vunpack.c.l.b16 %v282
        %v541 = vunpack.c.l.b16 %v283
        %v542 = vunpack.c.l.b16 %v284
        %v543 = vunpack.c.l.b16 %v285
        %v544 = vunpack.c.l.b16 %v286
        %v545 = vunpack.c.l.b16 %v287
        %v546 = vunpack.c.l.b16 %v288
        %v547 = vunpack.c.l.b16 %v289
        %v548 = vunpack.c.l.b16 %v290
        %v549 = vunpack.c.l.b16 %v291
        %v550 = vunpack.c.l.b16 %v292
        %v551 = vunpack.c.l.b16 %v293
        %v552 = vunpack.c.l.b16 %v294
        %v553 = vunpack.c.l.b16 %v295
        %v554 = vunpack.c.l.b16 %v296
        %v555 = vunpack.c.l.b16 %v297
        %v556 = vpack.c.b16 %v525, %v524
        %v557 = vpack.c.b16 %v527, %v526
        %v558 = vpack.c.b16 %v529, %v528
        %v559 = vpack.c.b16 %v531, %v530
        %v560 = vpack.c.b16 %v533, %v532
        %v561 = vpack.c.b16 %v535, %v534
        %v562 = vpack.c.b16 %v537, %v536
        %v563 = vpack.c.b16 %v539, %v538
        %v564 = vpack.c.b16 %v541, %v540
        %v565 = vpack.c.b16 %v543, %v542
        %v566 = vpack.c.b16 %v545, %v544
        %v567 = vpack.c.b16 %v547, %v546
        %v568 = vpack.c.b16 %v549, %v548
        %v569 = vpack.c.b16 %v551, %v550
        %v570 = vpack.c.b16 %v553, %v552
        %v571 = vpack.c.b16 %v555, %v554
        %v574 = vunpack.c.l.b16 %v298
        %v575 = vunpack.c.h.b16 %v298
        %v576 = vunpack.c.l.b16 %v299
        %v577 = vunpack.c.h.b16 %v299
        %v578 = vpack.c.b16 %v576, %v574
        %v579 = vpack.c.b16 %v577, %v575
        %vm580 = vcmask 97280
        %v582 = vsel %vm580, %v556, 0
        %v585 = vsel %vm580, %v557, 0
        %v588 = vsel %vm580, %v558, 0
        %v591 = vsel %vm580, %v559, 0
        %v594 = vsel %vm580, %v560, 0
        %v597 = vsel %vm580, %v561, 0
        %v600 = vsel %vm580, %v562, 0
        %v603 = vsel %vm580, %v563, 0
        %v606 = vsel %vm580, %v564, 0
        %v609 = vsel %vm580, %v565, 0
        %v612 = vsel %vm580, %v566, 0
        %v615 = vsel %vm580, %v567, 0
        %v618 = vsel %vm580, %v568, 0
        %v621 = vsel %vm580, %v569, 0
        %v624 = vsel %vm580, %v570, 0
        %v627 = vsel %vm580, %v571, 0
        %vm629 = vcmask 1045504
        %v631 = vsel %vm629, %v578, 0
        %v634 = vsel %vm629, %v579, 0
        %636 = vmatpush.bf16.msra.mxu0 0
        %637 = vmatpush.bf16.msra.mxu0 0
        %638 = vmatpush.bf16.msra.mxu0 0
        %639 = vmatpush.bf16.msra.mxu0 0
        %640 = vmatpush.bf16.msra.mxu0 0
        %641 = vmatpush.bf16.msra.mxu0 0
        %642 = vmatpush.bf16.msra.mxu0 0
        %643 = vmatpush.bf16.msra.mxu0 %v631
        %644 = vmatmul.bf16.gmra.mxu0 %v582
        %v645 = vpop.f32.mrf.mxu0
        %v646 = vadd.f32 %v335, %v645
        %v647 = vpop.f32.mrf.mxu0
        %v648 = vadd.f32 %v340, %v647
        %649 = vmatmul.bf16.gmra.mxu0 %v585
        %v650 = vpop.f32.mrf.mxu0
        %v651 = vadd.f32 %v345, %v650
        %v652 = vpop.f32.mrf.mxu0
        %v653 = vadd.f32 %v350, %v652
        %654 = vmatmul.bf16.gmra.mxu0 %v588
        %v655 = vpop.f32.mrf.mxu0
        %v656 = vadd.f32 %v355, %v655
        %v657 = vpop.f32.mrf.mxu0
        %v658 = vadd.f32 %v360, %v657
        %659 = vmatmul.bf16.gmra.mxu0 %v591
        %v660 = vpop.f32.mrf.mxu0
        %v661 = vadd.f32 %v365, %v660
        %v662 = vpop.f32.mrf.mxu0
        %v663 = vadd.f32 %v370, %v662
        %664 = vmatmul.bf16.gmra.mxu0 %v594
        %v665 = vpop.f32.mrf.mxu0
        %v666 = vadd.f32 %v375, %v665
        %v667 = vpop.f32.mrf.mxu0
        %v668 = vadd.f32 %v380, %v667
        %669 = vmatmul.bf16.gmra.mxu0 %v597
        %v670 = vpop.f32.mrf.mxu0
        %v671 = vadd.f32 %v385, %v670
        %v672 = vpop.f32.mrf.mxu0
        %v673 = vadd.f32 %v390, %v672
        %674 = vmatmul.bf16.gmra.mxu0 %v600
        %v675 = vpop.f32.mrf.mxu0
        %v676 = vadd.f32 %v395, %v675
        %v677 = vpop.f32.mrf.mxu0
        %v678 = vadd.f32 %v400, %v677
        %679 = vmatmul.bf16.gmra.mxu0 %v603
        %v680 = vpop.f32.mrf.mxu0
        %v681 = vadd.f32 %v405, %v680
        %v682 = vpop.f32.mrf.mxu0
        %v683 = vadd.f32 %v410, %v682
        %684 = vmatmul.bf16.gmra.mxu0 %v606
        %v685 = vpop.f32.mrf.mxu0
        %v686 = vadd.f32 %v415, %v685
        %v687 = vpop.f32.mrf.mxu0
        %v688 = vadd.f32 %v420, %v687
        %689 = vmatmul.bf16.gmra.mxu0 %v609
        %v690 = vpop.f32.mrf.mxu0
        %v691 = vadd.f32 %v425, %v690
        %v692 = vpop.f32.mrf.mxu0
        %v693 = vadd.f32 %v430, %v692
        %694 = vmatmul.bf16.gmra.mxu0 %v612
        %v695 = vpop.f32.mrf.mxu0
        %v696 = vadd.f32 %v435, %v695
        %v697 = vpop.f32.mrf.mxu0
        %v698 = vadd.f32 %v440, %v697
        %699 = vmatmul.bf16.gmra.mxu0 %v615
        %v700 = vpop.f32.mrf.mxu0
        %v701 = vadd.f32 %v445, %v700
        %v702 = vpop.f32.mrf.mxu0
        %v703 = vadd.f32 %v450, %v702
        %704 = vmatmul.bf16.gmra.mxu0 %v618
        %v705 = vpop.f32.mrf.mxu0
        %v706 = vadd.f32 %v455, %v705
        %v707 = vpop.f32.mrf.mxu0
        %v708 = vadd.f32 %v460, %v707
        %709 = vmatmul.bf16.gmra.mxu0 %v621
        %v710 = vpop.f32.mrf.mxu0
        %v711 = vadd.f32 %v465, %v710
        %v712 = vpop.f32.mrf.mxu0
        %v713 = vadd.f32 %v470, %v712
        %714 = vmatmul.bf16.gmra.mxu0 %v624
        %v715 = vpop.f32.mrf.mxu0
        %v716 = vadd.f32 %v475, %v715
        %v717 = vpop.f32.mrf.mxu0
        %v718 = vadd.f32 %v480, %v717
        %719 = vmatmul.bf16.gmra.mxu0 %v627
        %v720 = vpop.f32.mrf.mxu0
        %v721 = vadd.f32 %v485, %v720
        %v722 = vpop.f32.mrf.mxu0
        %v723 = vadd.f32 %v490, %v722
        %724 = vdwg.mxu0
        %725 = vmatpush.bf16.msra.mxu0 0
        %726 = vmatpush.bf16.msra.mxu0 0
        %727 = vmatpush.bf16.msra.mxu0 0
        %728 = vmatpush.bf16.msra.mxu0 0
        %729 = vmatpush.bf16.msra.mxu0 0
        %730 = vmatpush.bf16.msra.mxu0 0
        %731 = vmatpush.bf16.msra.mxu0 0
        %732 = vmatpush.bf16.msra.mxu0 %v634
        %733 = vmatmul.bf16.gmra.mxu0 %v582
        %v734 = vpop.f32.mrf.mxu0
        %v735 = vadd.f32 %v335, %v734
        %v736 = vpop.f32.mrf.mxu0
        %v737 = vadd.f32 %v340, %v736
        %738 = vmatmul.bf16.gmra.mxu0 %v585
        %v739 = vpop.f32.mrf.mxu0
        %v740 = vadd.f32 %v345, %v739
        %v741 = vpop.f32.mrf.mxu0
        %v742 = vadd.f32 %v350, %v741
        %743 = vmatmul.bf16.gmra.mxu0 %v588
        %v744 = vpop.f32.mrf.mxu0
        %v745 = vadd.f32 %v355, %v744
        %v746 = vpop.f32.mrf.mxu0
        %v747 = vadd.f32 %v360, %v746
        %748 = vmatmul.bf16.gmra.mxu0 %v591
        %v749 = vpop.f32.mrf.mxu0
        %v750 = vadd.f32 %v365, %v749
        %v751 = vpop.f32.mrf.mxu0
        %v752 = vadd.f32 %v370, %v751
        %753 = vmatmul.bf16.gmra.mxu0 %v594
        %v754 = vpop.f32.mrf.mxu0
        %v755 = vadd.f32 %v375, %v754
        %v756 = vpop.f32.mrf.mxu0
        %v757 = vadd.f32 %v380, %v756
        %758 = vmatmul.bf16.gmra.mxu0 %v597
        %v759 = vpop.f32.mrf.mxu0
        %v760 = vadd.f32 %v385, %v759
        %v761 = vpop.f32.mrf.mxu0
        %v762 = vadd.f32 %v390, %v761
        %763 = vmatmul.bf16.gmra.mxu0 %v600
        %v764 = vpop.f32.mrf.mxu0
        %v765 = vadd.f32 %v395, %v764
        %v766 = vpop.f32.mrf.mxu0
        %v767 = vadd.f32 %v400, %v766
        %768 = vmatmul.bf16.gmra.mxu0 %v603
        %v769 = vpop.f32.mrf.mxu0
        %v770 = vadd.f32 %v405, %v769
        %v771 = vpop.f32.mrf.mxu0
        %v772 = vadd.f32 %v410, %v771
        %773 = vmatmul.bf16.gmra.mxu0 %v606
        %v774 = vpop.f32.mrf.mxu0
        %v775 = vadd.f32 %v415, %v774
        %v776 = vpop.f32.mrf.mxu0
        %v777 = vadd.f32 %v420, %v776
        %778 = vmatmul.bf16.gmra.mxu0 %v609
        %v779 = vpop.f32.mrf.mxu0
        %v780 = vadd.f32 %v425, %v779
        %v781 = vpop.f32.mrf.mxu0
        %v782 = vadd.f32 %v430, %v781
        %783 = vmatmul.bf16.gmra.mxu0 %v612
        %v784 = vpop.f32.mrf.mxu0
        %v785 = vadd.f32 %v435, %v784
        %v786 = vpop.f32.mrf.mxu0
        %v787 = vadd.f32 %v440, %v786
        %788 = vmatmul.bf16.gmra.mxu0 %v615
        %v789 = vpop.f32.mrf.mxu0
        %v790 = vadd.f32 %v445, %v789
        %v791 = vpop.f32.mrf.mxu0
        %v792 = vadd.f32 %v450, %v791
        %793 = vmatmul.bf16.gmra.mxu0 %v618
        %v794 = vpop.f32.mrf.mxu0
        %v795 = vadd.f32 %v455, %v794
        %v796 = vpop.f32.mrf.mxu0
        %v797 = vadd.f32 %v460, %v796
        %798 = vmatmul.bf16.gmra.mxu0 %v621
        %v799 = vpop.f32.mrf.mxu0
        %v800 = vadd.f32 %v465, %v799
        %v801 = vpop.f32.mrf.mxu0
        %v802 = vadd.f32 %v470, %v801
        %803 = vmatmul.bf16.gmra.mxu0 %v624
        %v804 = vpop.f32.mrf.mxu0
        %v805 = vadd.f32 %v475, %v804
        %v806 = vpop.f32.mrf.mxu0
        %v807 = vadd.f32 %v480, %v806
        %808 = vmatmul.bf16.gmra.mxu0 %v627
        %v809 = vpop.f32.mrf.mxu0
        %v810 = vadd.f32 %v485, %v809
        %v811 = vpop.f32.mrf.mxu0
        %v812 = vadd.f32 %v490, %v811
        %813 = vdwg.mxu0
        %v814 = vld [vmem:[%s3] sm:$0xff]
        %v815 = vpack.c.bf16 %v648, %v646
        %v816 = vpack.c.bf16 %v737, %v735
        %v817 = vpack.c.bf16 %v653, %v651
        %v818 = vpack.c.bf16 %v742, %v740
        %v819 = vpack.c.bf16 %v658, %v656
        %v820 = vpack.c.bf16 %v747, %v745
        %v821 = vpack.c.bf16 %v663, %v661
        %v822 = vpack.c.bf16 %v752, %v750
        %v823 = vpack.c.bf16 %v668, %v666
        %v824 = vpack.c.bf16 %v757, %v755
        %v825 = vpack.c.bf16 %v673, %v671
        %v826 = vpack.c.bf16 %v762, %v760
        %v827 = vpack.c.bf16 %v678, %v676
        %v828 = vpack.c.bf16 %v767, %v765
        %v829 = vpack.c.bf16 %v683, %v681
        %v830 = vpack.c.bf16 %v772, %v770
        %v831 = vpack.c.bf16 %v688, %v686
        %v832 = vpack.c.bf16 %v777, %v775
        %v833 = vpack.c.bf16 %v693, %v691
        %v834 = vpack.c.bf16 %v782, %v780
        %v835 = vpack.c.bf16 %v698, %v696
        %v836 = vpack.c.bf16 %v787, %v785
        %v837 = vpack.c.bf16 %v703, %v701
        %v838 = vpack.c.bf16 %v792, %v790
        %v839 = vpack.c.bf16 %v708, %v706
        %v840 = vpack.c.bf16 %v797, %v795
        %v841 = vpack.c.bf16 %v713, %v711
        %v842 = vpack.c.bf16 %v802, %v800
        %v843 = vpack.c.bf16 %v718, %v716
        %v844 = vpack.c.bf16 %v807, %v805
        %v845 = vpack.c.bf16 %v723, %v721
        %v846 = vpack.c.bf16 %v812, %v810
        %v847 = vld [vmem:[%s4] sm:$0xff]
        %849 = vset.pattern.permute.xlu0 0
        %850 = vperm.xlu0 %849, %v847
        %v851 = vpop.permute.xlu0 %850
        %v854 = vunpack.c.l.b16 %v814
        %v855 = vunpack.c.h.b16 %v814
        %v856 = vpack.c.b16 %v854, %v854
        %v857 = vpack.c.b16 %v855, %v855
        %860 = vmatpush.bf16.msra.mxu0 %v829
        %861 = vmatpush.bf16.msra.mxu0 %v827
        %862 = vmatpush.bf16.msra.mxu0 %v825
        %863 = vmatpush.bf16.msra.mxu0 %v823
        %864 = vmatpush.bf16.msra.mxu0 %v821
        %865 = vmatpush.bf16.msra.mxu0 %v819
        %866 = vmatpush.bf16.msra.mxu0 %v817
        %867 = vmatpush.bf16.msra.mxu0 %v815
        %868 = vmatmul.bf16.gmra.mxu0 %v856
        %v869 = vpop.f32.mrf.mxu0
        %v870 = vadd.f32 %v851, %v869
        %v871 = vpop.f32.mrf.mxu0
        %872 = vdwg.mxu0
        %873 = vmatpush.bf16.msra.mxu0 %v845
        %874 = vmatpush.bf16.msra.mxu0 %v843
        %875 = vmatpush.bf16.msra.mxu0 %v841
        %876 = vmatpush.bf16.msra.mxu0 %v839
        %877 = vmatpush.bf16.msra.mxu0 %v837
        %878 = vmatpush.bf16.msra.mxu0 %v835
        %879 = vmatpush.bf16.msra.mxu0 %v833
        %880 = vmatpush.bf16.msra.mxu0 %v831
        %881 = vmatmul.bf16.gmra.mxu0 %v857
        %v882 = vpop.f32.mrf.mxu0
        %v883 = vadd.f32 %v870, %v882
        %v884 = vpop.f32.mrf.mxu0
        %885 = vdwg.mxu0
        %886 = vmatpush.bf16.msra.mxu0 %v830
        %887 = vmatpush.bf16.msra.mxu0 %v828
        %888 = vmatpush.bf16.msra.mxu0 %v826
        %889 = vmatpush.bf16.msra.mxu0 %v824
        %890 = vmatpush.bf16.msra.mxu0 %v822
        %891 = vmatpush.bf16.msra.mxu0 %v820
        %892 = vmatpush.bf16.msra.mxu0 %v818
        %893 = vmatpush.bf16.msra.mxu0 %v816
        %894 = vmatmul.bf16.gmra.mxu0 %v856
        %v895 = vpop.f32.mrf.mxu0
        %v896 = vadd.f32 %v851, %v895
        %v897 = vpop.f32.mrf.mxu0
        %898 = vdwg.mxu0
        %899 = vmatpush.bf16.msra.mxu0 %v846
        %900 = vmatpush.bf16.msra.mxu0 %v844
        %901 = vmatpush.bf16.msra.mxu0 %v842
        %902 = vmatpush.bf16.msra.mxu0 %v840
        %903 = vmatpush.bf16.msra.mxu0 %v838
        %904 = vmatpush.bf16.msra.mxu0 %v836
        %905 = vmatpush.bf16.msra.mxu0 %v834
        %906 = vmatpush.bf16.msra.mxu0 %v832
        %907 = vmatmul.bf16.gmra.mxu0 %v857
        %v908 = vpop.f32.mrf.mxu0
        %v909 = vadd.f32 %v896, %v908
        %v910 = vpop.f32.mrf.mxu0
        %911 = vdwg.mxu0
        %v912 = vsub.f32 0.0, %v883
        %v913 = vsub.f32 0.0, %v909
        %v914 = vmul.f32 %v912, 1.442695
        %v915 = vpow.pop %v914
        %v916 = vmul.f32 %v913, 1.442695
        %v917 = vpow.pop %v916
        %v918 = vadd.f32 %v915, 1.0
        %v919 = vadd.f32 %v917, 1.0
        %v920 = vrcp.pop %v918
        %v921 = vrcp.pop %v919
        %922 = vst [vmem:[%s262] sm:$0xff] %v920
        %923 = vst [vmem:[%s262 + $0x8] sm:$0xff] %v921
        %s924 = sand.u32 %s137, 1
        %s925 = scalar_lea.sflag [#allocation4], %s924
        %s926 = sand.u32 %s137, 1
        %s927 = smul.addr %s926, 16
        %s928 = scalar_lea.vmem [#allocation3], %s927
        // Predicated region
        $region79: #{tpu_custom_call.1} parent=73 // pred_check
          %p929 = pneg %p147
        $region80: #{tpu_custom_call.1} parent=73 // pred_check_branch
          %931 = sbr.rel (%p929) target = $region82
        $region81: #{tpu_custom_call.1} parent=73 // pred_region
          %s932 = smul.u32 2, %s19
          %934 = vsyncadd %s925, 0
          %s935 = smul.addr %s932, 8
          %s936 = scalar_lea.hbm %s5, %s935
          %s938 = sshll.u32 %s928, 4
          %s939 = int_to_ptr.vmem [resolvable:$true] %s938
          %s940 = sshll.u32 %s936, 4
          %s941 = int_to_ptr.hbm [resolvable:$true] %s940
          %943 = dma.vmem_to_hbm [thread:$0]  %s939, 256, %s941, %s925
        $region82: #{tpu_custom_call.1} parent=73 // pred_fallthru
          _
      $region74: #{tpu_custom_call.1} parent=5 // pred_fallthru
        _
      %p944 = scmp.le.s32.totalorder 2, %s14
      // Predicated region
      $region83: #{tpu_custom_call.1} parent=5 // pred_check
        %p945 = pneg %p944
      $region84: #{tpu_custom_call.1} parent=5 // pred_check_branch
        %947 = sbr.rel (%p945) target = $region86
      $region85: #{tpu_custom_call.1} parent=5 // pred_region
        %s948 = ssub.s32 %s14, 2
        // Predicated region
        $region87: #{tpu_custom_call.1} parent=85 // pred_check
          %p949 = pneg %p153
        $region88: #{tpu_custom_call.1} parent=85 // pred_check_branch
          %951 = sbr.rel (%p949) target = $region90
        $region89: #{tpu_custom_call.1} parent=85 // pred_region
          %s952 = sand.u32 %s138, 1
          %s953 = scalar_lea.sflag [#allocation4], %s952
          %s954 = sand.u32 %s138, 1
          %s955 = smul.addr %s954, 16
          %s956 = scalar_lea.vmem [#allocation3], %s955
          %958 = dma.done %s953, 256
        $region90: #{tpu_custom_call.1} parent=85 // pred_fallthru
          _
      $region86: #{tpu_custom_call.1} parent=5 // pred_fallthru
        _
    $region6: #{tpu_custom_call.1} parent=1 // loop_footer
      %s18 = sadd.s32 1, %s14
    $region7: #{tpu_custom_call.1} parent=1 // loop_footer_branch
      %13 = sbr.rel target = $region3
    $region8: #{tpu_custom_call.1} parent=1 // loop_exit
      _
    %959 = vsyncpa [#allocation4], 1
    %s960 = scalar_lea.sflag [#allocation4], 1
    %961 = vsyncpa %s960, 1

</llo_original>
